<compile_context>
chip_gen: v7x
topology: tpu7x:2x2x1
jax: 0.10.0
libtpu: 0.0.40
codegen_flags: <defaults>
</compile_context>

<pallas_src>
import functools

import jax
import jax.numpy as jnp
from jax.experimental import pallas as pl
from jax.experimental.pallas import tpu as pltpu

DROPOUT_P = 0.1


def _round_up(x, m):
    return ((x + m - 1) // m) * m


def policy_kernel(x_ref, mask_ref, w1b1_ref, w2b2_ref, out_ref):
    # Unpack the fused (weight ; bias) slabs. These are plain array slices of
    # already-loaded VMEM tiles (static indices, negligible cost at this size).
    w1b1 = w1b1_ref[...]
    w1, b1 = w1b1[:-1, :], w1b1[-1:, :]
    w2b2 = w2b2_ref[...]
    w2, b2 = w2b2[:-1, :], w2b2[-1:, :]

    # fc1: (TB, D) @ (D, H) + (1, H)
    h = jnp.dot(x_ref[...], w1, preferred_element_type=jnp.float32) + b1

    # relu, then dropout as a single multiply by the pre-scaled keep mask
    # (mask entries are 0 or 1/(1-p)); identical to relu(dropout(.)) since the
    # mask is non-negative.
    h = jnp.maximum(h, 0.0) * mask_ref[...]

    # fc2: (TB, H) @ (H, O) + (1, O)
    logits = jnp.dot(h, w2, preferred_element_type=jnp.float32) + b2

    # softmax over dim=1 (last axis), numerically stabilized
    m = jnp.max(logits, axis=-1, keepdims=True)
    e = jnp.exp(logits - m)
    out_ref[...] = (e / jnp.sum(e, axis=-1, keepdims=True)).astype(out_ref.dtype)


@functools.partial(jax.jit, static_argnames=("training", "block_b"))
def policy_net_forward(x, w1, b1, w2, b2, key, *, training=True, block_b=128):
    B, D = x.shape
    H = w1.shape[1]
    O = w2.shape[1]

    # Pack weight+bias -> one contiguous DMA per layer.
    w1b1 = jnp.concatenate([w1, b1.reshape(1, H)], axis=0)  # (D+1, H)
    w2b2 = jnp.concatenate([w2, b2.reshape(1, O)], axis=0)  # (H+1, O)

    # Dropout mask, matching F.dropout(p, training=True) semantics by default.
    if training:
        keep = jax.random.bernoulli(key, 1.0 - DROPOUT_P, (B, H))
        mask = keep.astype(jnp.float32) * (1.0 / (1.0 - DROPOUT_P))
    else:
        mask = jnp.ones((B, H), jnp.float32)

    # Batch tiling: one grid axis over batch tiles (parallel across cores on
    # v7x). Pad B up to a multiple of the tile.
    tb = min(block_b, _round_up(B, 8))
    Bp = _round_up(B, tb)
    if Bp != B:
        x = jnp.pad(x, ((0, Bp - B), (0, 0)))
        mask = jnp.pad(mask, ((0, Bp - B), (0, 0)))

    out = pl.pallas_call(
        policy_kernel,
        out_shape=jax.ShapeDtypeStruct((Bp, O), jnp.float32),
        grid=(Bp // tb,),
        in_specs=[
            pl.BlockSpec((tb, D), lambda i: (i, 0)),        # x (batch-tiled)
            pl.BlockSpec((tb, H), lambda i: (i, 0)),        # dropout mask
            pl.BlockSpec((D + 1, H), lambda i: (0, 0)),     # [w1; b1] resident
            pl.BlockSpec((H + 1, O), lambda i: (0, 0)),     # [w2; b2] resident
        ],
        out_specs=pl.BlockSpec((tb, O), lambda i: (i, 0)),
        compiler_params=pltpu.CompilerParams(
            dimension_semantics=("parallel",)),
    )(x, mask, w1b1, w2b2)
    return out[:B]


def init_params(key, input_size, hidden, outputs):
    """Deterministic init matching nn.Linear's default U(-1/sqrt(in), 1/sqrt(in))."""
    k1, k2, k3, k4 = jax.random.split(key, 4)
    lim1 = 1.0 / (input_size ** 0.5)
    lim2 = 1.0 / (hidden ** 0.5)
    w1 = jax.random.uniform(k1, (input_size, hidden), jnp.float32, -lim1, lim1)
    b1 = jax.random.uniform(k2, (hidden,), jnp.float32, -lim1, lim1)
    w2 = jax.random.uniform(k3, (hidden, outputs), jnp.float32, -lim2, lim2)
    b2 = jax.random.uniform(k4, (outputs,), jnp.float32, -lim2, lim2)
    return w1, b1, w2, b2


if __name__ == "__main__":
    # CartPole-v0: observation dim = 4, action dim = 2.
    input_size, hidden, outputs = 4, 32, 2
    batch = 8

    key = jax.random.PRNGKey(0)
    k_x, k_p, k_drop = jax.random.split(key, 3)
    x = jax.random.normal(k_x, (batch, input_size), dtype=jnp.float32)
    w1, b1, w2, b2 = init_params(k_p, input_size, hidden, outputs)

    probs = policy_net_forward(x, w1, b1, w2, b2, k_drop, training=True)
    probs = jax.block_until_ready(probs)

    assert probs.shape == (batch, outputs)
    assert bool(jnp.all(jnp.isfinite(probs)))
    assert bool(jnp.all(probs >= 0.0))
    # rows of a softmax must sum to 1
    assert bool(jnp.allclose(jnp.sum(probs, axis=1), 1.0, atol=1e-5))

    # sanity: eval-style (no dropout) path also runs
    probs_eval = jax.block_until_ready(
        policy_net_forward(x, w1, b1, w2, b2, k_drop, training=False))
    assert bool(jnp.allclose(jnp.sum(probs_eval, axis=1), 1.0, atol=1e-5))

    print("KERNEL_OK")
</pallas_src>

<mosaic_0001>
module attributes {stable_mosaic.version = 11 : i64} {
  func.func @policy_kernel(%arg0: i32, %arg1: memref<8x4xf32, #tpu.memory_space<vmem>>, %arg2: memref<8x32xf32, #tpu.memory_space<vmem>>, %arg3: memref<5x32xf32, #tpu.memory_space<vmem>>, %arg4: memref<33x2xf32, #tpu.memory_space<vmem>>, %arg5: memref<8x2xf32, #tpu.memory_space<vmem>>) attributes {dimension_semantics = [#tpu.dimension_semantics<parallel>], iteration_bounds = array<i64: 1>, scalar_prefetch = 0 : i64, scratch_operands = 0 : i64, tpu.core_type = #tpu.core_type<tc>, window_params = [{transform_indices = @transform_0, window_bounds = array<i64: 8, 4>}, {transform_indices = @transform_1, window_bounds = array<i64: 8, 32>}, {pipeline_mode = #tpu.pipeline_mode<synchronous>, transform_indices = @transform_2, window_bounds = array<i64: 5, 32>}, {pipeline_mode = #tpu.pipeline_mode<synchronous>, transform_indices = @transform_3, window_bounds = array<i64: 33, 2>}, {transform_indices = @transform_4, window_bounds = array<i64: 8, 2>}]} {
    %c0 = arith.constant 0 : index
    %c0_0 = arith.constant 0 : index
    %0 = vector.load %arg3[%c0, %c0_0] : memref<5x32xf32, #tpu.memory_space<vmem>>, vector<5x32xf32>
    %1 = vector.extract_strided_slice %0 {offsets = [0, 0], sizes = [4, 32], strides = [1, 1]} : vector<5x32xf32> to vector<4x32xf32>
    %2 = vector.extract_strided_slice %0 {offsets = [4, 0], sizes = [1, 32], strides = [1, 1]} : vector<5x32xf32> to vector<1x32xf32>
    %c0_1 = arith.constant 0 : index
    %c0_2 = arith.constant 0 : index
    %3 = vector.load %arg4[%c0_1, %c0_2] : memref<33x2xf32, #tpu.memory_space<vmem>>, vector<33x2xf32>
    %4 = vector.extract_strided_slice %3 {offsets = [0, 0], sizes = [32, 2], strides = [1, 1]} : vector<33x2xf32> to vector<32x2xf32>
    %5 = vector.extract_strided_slice %3 {offsets = [32, 0], sizes = [1, 2], strides = [1, 1]} : vector<33x2xf32> to vector<1x2xf32>
    %c0_3 = arith.constant 0 : index
    %c0_4 = arith.constant 0 : index
    %6 = vector.load %arg1[%c0_3, %c0_4] : memref<8x4xf32, #tpu.memory_space<vmem>>, vector<8x4xf32>
    %cst = arith.constant dense<0.000000e+00> : vector<8x32xf32>
    %7 = tpu.matmul %6, %1, %cst {dimension_numbers = #tpu.dot_dimension_numbers<[1], [0], [0], [1], [0, 0, 1, 1], [], []>} : vector<8x4xf32>, vector<4x32xf32>, vector<8x32xf32> -> vector<8x32xf32>
    %8 = vector.broadcast %2 : vector<1x32xf32> to vector<8x32xf32>
    %9 = arith.addf %7, %8 : vector<8x32xf32>
    %cst_5 = arith.constant 0.000000e+00 : f32
    %10 = vector.broadcast %cst_5 : f32 to vector<8x32xf32>
    %11 = arith.maximumf %9, %10 : vector<8x32xf32>
    %c0_6 = arith.constant 0 : index
    %c0_7 = arith.constant 0 : index
    %12 = vector.load %arg2[%c0_6, %c0_7] : memref<8x32xf32, #tpu.memory_space<vmem>>, vector<8x32xf32>
    %13 = arith.mulf %11, %12 : vector<8x32xf32>
    %cst_8 = arith.constant dense<0.000000e+00> : vector<8x2xf32>
    %14 = tpu.matmul %13, %4, %cst_8 {dimension_numbers = #tpu.dot_dimension_numbers<[1], [0], [0], [1], [0, 0, 1, 1], [], []>} : vector<8x32xf32>, vector<32x2xf32>, vector<8x2xf32> -> vector<8x2xf32>
    %15 = vector.broadcast %5 : vector<1x2xf32> to vector<8x2xf32>
    %16 = arith.addf %14, %15 : vector<8x2xf32>
    %cst_9 = arith.constant dense<0xFF800000> : vector<8xf32>
    %17 = vector.multi_reduction <maximumf>, %16, %cst_9 [1] : vector<8x2xf32> to vector<8xf32>
    %18 = vector.shape_cast %17 : vector<8xf32> to vector<8x1xf32>
    %19 = vector.broadcast %18 : vector<8x1xf32> to vector<8x2xf32>
    %20 = arith.subf %16, %19 : vector<8x2xf32>
    %21 = math.exp %20 : vector<8x2xf32>
    %cst_10 = arith.constant dense<0.000000e+00> : vector<8xf32>
    %22 = vector.multi_reduction <add>, %21, %cst_10 [1] : vector<8x2xf32> to vector<8xf32>
    %23 = vector.shape_cast %22 : vector<8xf32> to vector<8x1xf32>
    %24 = vector.broadcast %23 : vector<8x1xf32> to vector<8x2xf32>
    %25 = arith.divf %21, %24 : vector<8x2xf32>
    %c0_11 = arith.constant 0 : index
    %c0_12 = arith.constant 0 : index
    %26 = vector.load %arg5[%c0_11, %c0_12] : memref<8x2xf32, #tpu.memory_space<vmem>>, vector<8x2xf32>
    tpu.vector_store %arg5[%c0_11, %c0_12], %25 {strides = array<i32>} : memref<8x2xf32, #tpu.memory_space<vmem>>, vector<8x2xf32>,
    return
  }
  func.func @transform_0(%arg0: i32) -> (i32, i32) {
    %c0_i32 = arith.constant 0 : i32
    %c0_i32_0 = arith.constant 0 : i32
    return %arg0, %c0_i32 : i32, i32
  }
  func.func @transform_1(%arg0: i32) -> (i32, i32) {
    %c0_i32 = arith.constant 0 : i32
    %c0_i32_0 = arith.constant 0 : i32
    return %arg0, %c0_i32 : i32, i32
  }
  func.func @transform_2(%arg0: i32) -> (i32, i32) {
    %c0_i32 = arith.constant 0 : i32
    %c0_i32_0 = arith.constant 0 : i32
    %c0_i32_1 = arith.constant 0 : i32
    return %c0_i32, %c0_i32_0 : i32, i32
  }
  func.func @transform_3(%arg0: i32) -> (i32, i32) {
    %c0_i32 = arith.constant 0 : i32
    %c0_i32_0 = arith.constant 0 : i32
    %c0_i32_1 = arith.constant 0 : i32
    return %c0_i32, %c0_i32_0 : i32, i32
  }
  func.func @transform_4(%arg0: i32) -> (i32, i32) {
    %c0_i32 = arith.constant 0 : i32
    %c0_i32_0 = arith.constant 0 : i32
    return %arg0, %c0_i32 : i32, i32
  }
}

</mosaic_0001>

<llo_original>
// kernel: policy_net_forward.1
$region0: #{policy_net_forward.1}
  #allocation0 [shape = 'u32[]', space=smem, size = 0x4, offset = 0x4, fixed_abs, tag = 'smem constant byte address 0x4 - core index']
  #allocation1 [shape = 'u32[144,128]{1,0:T(1,128)}', space=vmem, size = 0x12000, scoped, tag = 'internal scratch']
  %s0 = inlined_call_operand.vmem [shape: f32[8,4], index: 0, kind: input, shape index: {}]
  %s1 = inlined_call_operand.vmem [shape: f32[8,32], index: 1, kind: input, shape index: {}]
  %s2 = inlined_call_operand.vmem [shape: f32[5,32], index: 2, kind: input, shape index: {}]
  %s3 = inlined_call_operand.vmem [shape: f32[33,2], index: 3, kind: input, shape index: {}]
  %s4 = inlined_call_operand.vmem [shape: f32[8,2], index: 4, kind: output, shape index: {}]
  %s5 = sld [smem:[#allocation0]]
  $region26: #{policy_net_forward.1} parent=0
    _
  %s7 = ssub.s32 1, %s5
  %s8 = scalar_select 0, %s7, %s5
  // Predicated region
  $region2: #{policy_net_forward.1} parent=0 // pred_check
    _
  $region3: #{policy_net_forward.1} parent=0 // pred_check_branch
    %10 = sbr.rel (0) target = $region5
  $region4: #{policy_net_forward.1} parent=0 // pred_region
    _
  $region5: #{policy_net_forward.1} parent=0 // pred_fallthru
    _
  // Predicated region
  $region6: #{policy_net_forward.1} parent=0 // pred_check
    _
  $region7: #{policy_net_forward.1} parent=0 // pred_check_branch
    %12 = sbr.rel (0) target = $region9
  $region8: #{policy_net_forward.1} parent=0 // pred_region
    _
  $region9: #{policy_net_forward.1} parent=0 // pred_fallthru
    _
  // Predicated region
  $region10: #{policy_net_forward.1} parent=0 // pred_check
    _
  $region11: #{policy_net_forward.1} parent=0 // pred_check_branch
    %14 = sbr.rel (0) target = $region13
  $region12: #{policy_net_forward.1} parent=0 // pred_region
    _
  $region13: #{policy_net_forward.1} parent=0 // pred_fallthru
    _
  // Predicated region
  $region14: #{policy_net_forward.1} parent=0 // pred_check
    _
  $region15: #{policy_net_forward.1} parent=0 // pred_check_branch
    %16 = sbr.rel (0) target = $region17
  $region16: #{policy_net_forward.1} parent=0 // pred_region
    _
  $region17: #{policy_net_forward.1} parent=0 // pred_fallthru
    _
  %v17 = vld [vmem:[%s2] sm:$0x1f]
  %v18 = vld [vmem:[%s3] sm:$0xff]
  %v19 = vld [vmem:[%s3 + $0x8] sm:$0xff]
  %v20 = vld [vmem:[%s3 + $0x10] sm:$0xff]
  %v21 = vld [vmem:[%s3 + $0x18] sm:$0xff]
  %v22 = vld [vmem:[%s3 + $0x20] sm:$0x1]
  %v23 = vld [vmem:[%s0] sm:$0xff]
  %v24 = vlaneseq
  %v25 = vshrl.u32 %v24, 7
  %v26 = vsub.s32 4, %v25
  %v27 = vrot.slane %v17, %v26
  %vm28 = vcmask 31744
  %v30 = vsel %vm28, %v23, 0
  %vm32 = vcmask 1043456
  %v34 = vsel %vm32, %v17, 0
  %36 = vmatprep.subr.mxu0 0.0
  %37 = vmatpush1.msra.mxu0 %v34
  %38 = vmatprep.subr.mxu0 0.0
  %39 = vmatpush1.msra.mxu0 0.0
  %40 = vmatprep.subr.mxu0 0.0
  %41 = vmatpush1.msra.mxu0 0.0
  %42 = vmatprep.subr.mxu0 0.0
  %43 = vmatpush1.msra.mxu0 0.0
  %44 = vmatprep.subr.mxu0 0.0
  %45 = vmatpush1.msra.mxu0 0.0
  %46 = vmatprep.subr.mxu0 0.0
  %47 = vmatpush1.msra.mxu0 0.0
  %48 = vmatprep.subr.mxu0 0.0
  %49 = vmatpush1.msra.mxu0 0.0
  %50 = vmatprep.subr.mxu0 0.0
  %51 = vmatpush1.msra.mxu0 0.0
  %52 = vmatprep.subr.mxu0 0.0
  %53 = vmatpush1.msra.mxu0 0.0
  %54 = vmatprep.subr.mxu0 0.0
  %55 = vmatpush1.msra.mxu0 0.0
  %56 = vmatprep.subr.mxu0 0.0
  %57 = vmatpush1.msra.mxu0 0.0
  %58 = vmatprep.subr.mxu0 0.0
  %59 = vmatpush1.msra.mxu0 0.0
  %60 = vmatprep.subr.mxu0 0.0
  %61 = vmatpush1.msra.mxu0 0.0
  %62 = vmatprep.subr.mxu0 0.0
  %63 = vmatpush1.msra.mxu0 0.0
  %64 = vmatprep.subr.mxu0 0.0
  %65 = vmatpush1.msra.mxu0 0.0
  %66 = vmatprep.subr.mxu0 0.0
  %67 = vmatpush1.msra.mxu0 0.0
  %68 = vmatprep.subr.mxu0 0.0
  %69 = vmatpush1.msra.mxu0 0.0
  %70 = vmatprep.subr.mxu0 0.0
  %71 = vmatpush1.msra.mxu0 0.0
  %72 = vmatprep.subr.mxu0 0.0
  %73 = vmatpush1.msra.mxu0 0.0
  %74 = vmatprep.subr.mxu0 0.0
  %75 = vmatpush1.msra.mxu0 0.0
  %76 = vmatprep.subr.mxu0 0.0
  %77 = vmatpush1.msra.mxu0 0.0
  %78 = vmatprep.subr.mxu0 0.0
  %79 = vmatpush1.msra.mxu0 0.0
  %80 = vmatprep.subr.mxu0 0.0
  %81 = vmatpush1.msra.mxu0 0.0
  %82 = vmatprep.subr.mxu0 0.0
  %83 = vmatpush1.msra.mxu0 0.0
  %84 = vmatprep.subr.mxu0 0.0
  %85 = vmatpush1.msra.mxu0 0.0
  %86 = vmatprep.subr.mxu0 0.0
  %87 = vmatpush1.msra.mxu0 0.0
  %88 = vmatprep.subr.mxu0 0.0
  %89 = vmatpush1.msra.mxu0 0.0
  %90 = vmatprep.subr.mxu0 0.0
  %91 = vmatpush1.msra.mxu0 0.0
  %92 = vmatprep.subr.mxu0 0.0
  %93 = vmatpush1.msra.mxu0 0.0
  %94 = vmatprep.subr.mxu0 0.0
  %95 = vmatpush1.msra.mxu0 0.0
  %96 = vmatprep.subr.mxu0 0.0
  %97 = vmatpush1.msra.mxu0 0.0
  %98 = vmatprep.subr.mxu0 0.0
  %99 = vmatpush1.msra.mxu0 0.0
  %100 = vmatprep.mubr.f32.mxu0 0.0
  %101 = vmatmul.mubr.f32.gmra.mrb[0].mxu0 %v30
  %v102 = vpop.f32.mrb[0].mxu0
  %v103 = vadd.f32 %v27, %v102
  %v104 = vpop.f32.mrb[0].mxu0
  %105 = vdwg.mxu0
  %v106 = vmax.f32 %v103, 0.0
  %v107 = vld [vmem:[%s1] sm:$0xff]
  %v108 = vmul.f32 %v106, %v107
  %v109 = vlaneseq
  %v110 = vshrl.u32 %v109, 7
  %v111 = vsub.s32 0, %v110
  %v112 = vrot.slane %v22, %v111
  %vm113 = vcmask 261120
  %v115 = vsel %vm113, %v108, 0
  %117 = vmatprep.subr.mxu0 0.0
  %118 = vmatpush1.msra.mxu0 %v18
  %119 = vmatprep.subr.mxu0 0.0
  %120 = vmatpush1.msra.mxu0 %v19
  %121 = vmatprep.subr.mxu0 0.0
  %122 = vmatpush1.msra.mxu0 %v20
  %123 = vmatprep.subr.mxu0 0.0
  %124 = vmatpush1.msra.mxu0 %v21
  %125 = vmatprep.subr.mxu0 0.0
  %126 = vmatpush1.msra.mxu0 0.0
  %127 = vmatprep.subr.mxu0 0.0
  %128 = vmatpush1.msra.mxu0 0.0
  %129 = vmatprep.subr.mxu0 0.0
  %130 = vmatpush1.msra.mxu0 0.0
  %131 = vmatprep.subr.mxu0 0.0
  %132 = vmatpush1.msra.mxu0 0.0
  %133 = vmatprep.subr.mxu0 0.0
  %134 = vmatpush1.msra.mxu0 0.0
  %135 = vmatprep.subr.mxu0 0.0
  %136 = vmatpush1.msra.mxu0 0.0
  %137 = vmatprep.subr.mxu0 0.0
  %138 = vmatpush1.msra.mxu0 0.0
  %139 = vmatprep.subr.mxu0 0.0
  %140 = vmatpush1.msra.mxu0 0.0
  %141 = vmatprep.subr.mxu0 0.0
  %142 = vmatpush1.msra.mxu0 0.0
  %143 = vmatprep.subr.mxu0 0.0
  %144 = vmatpush1.msra.mxu0 0.0
  %145 = vmatprep.subr.mxu0 0.0
  %146 = vmatpush1.msra.mxu0 0.0
  %147 = vmatprep.subr.mxu0 0.0
  %148 = vmatpush1.msra.mxu0 0.0
  %149 = vmatprep.subr.mxu0 0.0
  %150 = vmatpush1.msra.mxu0 0.0
  %151 = vmatprep.subr.mxu0 0.0
  %152 = vmatpush1.msra.mxu0 0.0
  %153 = vmatprep.subr.mxu0 0.0
  %154 = vmatpush1.msra.mxu0 0.0
  %155 = vmatprep.subr.mxu0 0.0
  %156 = vmatpush1.msra.mxu0 0.0
  %157 = vmatprep.subr.mxu0 0.0
  %158 = vmatpush1.msra.mxu0 0.0
  %159 = vmatprep.subr.mxu0 0.0
  %160 = vmatpush1.msra.mxu0 0.0
  %161 = vmatprep.subr.mxu0 0.0
  %162 = vmatpush1.msra.mxu0 0.0
  %163 = vmatprep.subr.mxu0 0.0
  %164 = vmatpush1.msra.mxu0 0.0
  %165 = vmatprep.subr.mxu0 0.0
  %166 = vmatpush1.msra.mxu0 0.0
  %167 = vmatprep.subr.mxu0 0.0
  %168 = vmatpush1.msra.mxu0 0.0
  %169 = vmatprep.subr.mxu0 0.0
  %170 = vmatpush1.msra.mxu0 0.0
  %171 = vmatprep.subr.mxu0 0.0
  %172 = vmatpush1.msra.mxu0 0.0
  %173 = vmatprep.subr.mxu0 0.0
  %174 = vmatpush1.msra.mxu0 0.0
  %175 = vmatprep.subr.mxu0 0.0
  %176 = vmatpush1.msra.mxu0 0.0
  %177 = vmatprep.subr.mxu0 0.0
  %178 = vmatpush1.msra.mxu0 0.0
  %179 = vmatprep.subr.mxu0 0.0
  %180 = vmatpush1.msra.mxu0 0.0
  %181 = vmatprep.mubr.f32.mxu0 0.0
  %182 = vmatmul.mubr.f32.gmra.mrb[0].mxu0 %v115
  %v183 = vpop.f32.mrb[0].mxu0
  %v184 = vadd.f32 %v112, %v183
  %v185 = vpop.f32.mrb[0].mxu0
  %186 = vdwg.mxu0
  %vm187 = vcmask 15360
  %v188 = vsel %vm187, %v184, -inf
  %189 = vmax.xlane.f32.xlu0 %v188
  %v190 = vpop.xlane.xlu0 %189
  %v191 = vsub.f32 %v184, %v190
  %v192 = vmul.f32 %v191, 1.442695
  %v193 = vpow.pop %v192
  %v194 = vsel %vm187, %v193, 0.0
  %195 = vadd.xlane.f32.xlu0 %v194
  %v196 = vpop.xlane.xlu0 %195
  %v197 = vrcp.pop %v196
  %v198 = vmul.f32 %v193, %v197
  %199 = vst.msk [vmem:[%s4] sm:$0xff] %vm187, %v198
  // Predicated region
  $region18: #{policy_net_forward.1} parent=0 // pred_check
    _
  $region19: #{policy_net_forward.1} parent=0 // pred_check_branch
    %201 = sbr.rel (0) target = $region21
  $region20: #{policy_net_forward.1} parent=0 // pred_region
    _
  $region21: #{policy_net_forward.1} parent=0 // pred_fallthru
    _
  // Predicated region
  $region22: #{policy_net_forward.1} parent=0 // pred_check
    _
  $region23: #{policy_net_forward.1} parent=0 // pred_check_branch
    %203 = sbr.rel (0) target = $region25
  $region24: #{policy_net_forward.1} parent=0 // pred_region
    _
  $region25: #{policy_net_forward.1} parent=0 // pred_fallthru
    _

</llo_original>
